<compile_context>
chip_gen: v7x
topology: tpu7x:2x2x1
jax: 0.10.0
libtpu: 0.0.40
codegen_flags: <defaults>
</compile_context>

<pallas_src>
import functools

import jax
import jax.numpy as jnp
from jax.experimental import pallas as pl
from jax.experimental.pallas import tpu as pltpu


def _round_up(x, m):
    return ((x + m - 1) // m) * m


def _divisors_desc(total, unit):
    """Divisors of `total` that are multiples of `unit`, largest first."""
    return [d for d in range(total, unit - 1, -unit) if total % d == 0]


def _vmem_capacity_bytes():
    try:
        info = pltpu.get_tpu_info()
        cap = getattr(info, "vmem_capacity_bytes", None)
        if cap:
            return int(cap)
    except Exception:
        pass
    return 64 << 20  # conservative default (v7x has the smallest VMEM per core)


def _footprint(tb, tn, tk, f_pad, w_bytes, carry_bytes, x_bytes, o_bytes):
    """Joint resident-VMEM estimate for one grid step (all buffers summed)."""
    fp = 2 * tk * tn * w_bytes            # weight tile, double-buffered
    fp += 2 * 8 * tn * w_bytes            # bias tile (sublane-padded), double-buffered
    fp += 2 * tb * f_pad * carry_bytes    # ping-pong layer carry
    fp += tb * f_pad * x_bytes            # x block (single-buffered)
    fp += tb * f_pad * o_bytes            # output block (single-buffered)
    fp += 2 * tb * tn * 4                 # dot output / f32 epilogue intermediates
    if tk != f_pad:
        fp += tb * tn * 4                 # K accumulator scratch
    return fp


def _select_tiles(b_pad, f_pad, budget, w_bytes, carry_bytes, x_bytes, o_bytes):
    """Pick (tb, tn, tk).

    Priority: largest tb first (nb = 1 avoids re-streaming the weights once per
    batch tile -> weight-bandwidth bound regime), then full-K, then shrink the
    output-feature tile tn before anything else.
    """
    tb_cands = _divisors_desc(b_pad, 8)
    f_cands = _divisors_desc(f_pad, 128)
    for tb in tb_cands:
        # Buffers that do not shrink with tn/tk; skip hopeless tb early.
        base = 2 * tb * f_pad * carry_bytes + tb * f_pad * (x_bytes + o_bytes)
        if base + 2 * 128 * 128 * w_bytes + 3 * tb * 128 * 4 > budget:
            continue
        for tk in f_cands:            # prefer full-K (no accumulator pass) ...
            for tn in f_cands:        # ... shrink the output-feature tile first
                if _footprint(tb, tn, tk, f_pad, w_bytes, carry_bytes,
                              x_bytes, o_bytes) <= budget:
                    return tb, tn, tk
    # Minimal fallback (may still exceed budget for absurd F -> compile-time error).
    return tb_cands[-1], 128, 128


def _mlp_kernel(x_ref, w_ref, b_ref, o_ref, *scratch, nt, nk, tn, tk):
    """One grid step = one (batch tile, layer, output-feature tile, K tile).

    x_ref:   (TB, Fp)        input block, resident per batch tile (Buffered(1))
    w_ref:   (1, tk, tn)     weight tile, already laid out (in, out)
    b_ref:   (1, 1, tn)      bias tile for this layer / output tile
    o_ref:   (TB, Fp)        output block, resident per batch tile (Buffered(1))
    scratch: [(2, TB, Fp) carry (weight dtype)] + [(TB, tn) f32 acc if nk > 1]
    """
    act_ref = scratch[0]
    acc_ref = scratch[1] if nk > 1 else None

    l = pl.program_id(1)
    j = pl.program_id(2)
    k = pl.program_id(3)
    n_layers = pl.num_programs(1)

    # Seed the layer carry once per batch tile (first step of its layer chain).
    @pl.when((l == 0) & (j == 0) & (k == 0))
    def _():
        act_ref[0] = x_ref[...].astype(act_ref.dtype)

    in_slot = l % 2
    out_slot = (l + 1) % 2

    w = w_ref[0]                                    # (tk, tn) — no transpose needed
    if nk == 1:
        a = act_ref[in_slot]                        # (TB, Fp), already weight dtype
    else:
        row = pl.multiple_of(k * tk, 128)
        a = act_ref[in_slot, :, pl.ds(row, tk)]     # (TB, tk)

    part = jnp.dot(a, w, preferred_element_type=jnp.float32)

    def _finalize(y_acc):
        y = y_acc + b_ref[0].astype(jnp.float32)    # f32 epilogue, (1, tn) broadcast
        if nt == 1:
            @pl.when(l < n_layers - 1)              # skip carry write on last layer
            def _():
                act_ref[out_slot] = y.astype(act_ref.dtype)

            @pl.when(l == n_layers - 1)
            def _():
                o_ref[...] = y.astype(o_ref.dtype)
        else:
            col = pl.multiple_of(j * tn, 128)

            @pl.when(l < n_layers - 1)
            def _():
                act_ref[out_slot, :, pl.ds(col, tn)] = y.astype(act_ref.dtype)

            @pl.when(l == n_layers - 1)
            def _():
                o_ref[:, pl.ds(col, tn)] = y.astype(o_ref.dtype)

    if nk == 1:
        _finalize(part)
    else:
        @pl.when(k == 0)
        def _():
            acc_ref[...] = part

        @pl.when(k > 0)
        def _():
            acc_ref[...] = acc_ref[...] + part

        @pl.when(k == nk - 1)
        def _():
            _finalize(acc_ref[...])


def prepare_params(weights, biases):
    """One-time layout plumbing — cache the result as model state.

    PyTorch nn.Linear stores W as (out, in); transpose once to (in, out) so the
    kernel feeds the MXU directly, and zero-pad features to a lane multiple.
    Zero padding is exact: padded feature columns stay identically zero.
    """
    n_layers, n_features, n_features2 = weights.shape
    assert n_features == n_features2
    f_pad = _round_up(n_features, 128)
    w_t = jnp.transpose(weights, (0, 2, 1))
    if f_pad != n_features:
        pad = f_pad - n_features
        w_t = jnp.pad(w_t, ((0, 0), (0, pad), (0, pad)))
        b_p = jnp.pad(biases, ((0, 0), (0, pad)))
    else:
        b_p = biases
    return w_t, b_p.reshape(n_layers, 1, f_pad), n_features


def mymodel_forward_prepared(x, w_t, b_p, *, n_features):
    """Apply L layers of Linear(F, F) sequentially inside one pallas_call."""
    B, F = x.shape
    assert F == n_features
    L, F_pad, _ = w_t.shape
    B_pad = _round_up(B, 8)

    x_p = x
    if (B_pad, F_pad) != (B, F):
        x_p = jnp.pad(x, ((0, B_pad - B), (0, F_pad - F)))

    w_bytes = jnp.dtype(w_t.dtype).itemsize
    x_bytes = jnp.dtype(x.dtype).itemsize
    o_bytes = x_bytes
    # Layer carry lives in the weight dtype: no per-tile recast before the MXU
    # and half the scratch for bf16 weights. Epilogue stays f32.
    carry_dtype = w_t.dtype
    carry_bytes = jnp.dtype(carry_dtype).itemsize

    vmem_cap = _vmem_capacity_bytes()
    budget = max(min(vmem_cap - (16 << 20), 96 << 20), 8 << 20)

    tb, tn, tk = _select_tiles(B_pad, F_pad, budget, w_bytes, carry_bytes,
                               x_bytes, o_bytes)
    nb, nt, nk = B_pad // tb, F_pad // tn, F_pad // tk

    fp = _footprint(tb, tn, tk, F_pad, w_bytes, carry_bytes, x_bytes, o_bytes)
    # Always declare the scoped-VMEM limit (v5e defaults to 16 MiB, v6e/v7x to
    # 32 MiB); cap below physical VMEM to leave Mosaic internal-scratch headroom.
    vmem_limit = min(max(int(fp * 1.4) + (6 << 20), 16 << 20),
                     vmem_cap - (8 << 20))

    kernel = functools.partial(_mlp_kernel, nt=nt, nk=nk, tn=tn, tk=tk)

    scratch_shapes = [pltpu.VMEM((2, tb, F_pad), carry_dtype)]
    if nk > 1:
        scratch_shapes.append(pltpu.VMEM((tb, tn), jnp.float32))

    # Correctness relies on row-major grid iteration (last axis fastest): every
    # (j, k) tile of layer l is written before layer l+1 reads the carry.
    out = pl.pallas_call(
        kernel,
        out_shape=jax.ShapeDtypeStruct((B_pad, F_pad), x.dtype),
        grid_spec=pltpu.PrefetchScalarGridSpec(
            num_scalar_prefetch=0,
            grid=(nb, L, nt, nk),
            in_specs=[
                # x / out blocks only change with ib -> single-buffer them and
                # spend the saved VMEM on a bigger batch tile (nb = 1 keeps the
                # weights streamed from HBM exactly once).
                pl.BlockSpec((tb, F_pad), lambda ib, l, j, k: (ib, 0),
                             pipeline_mode=pl.Buffered(1)),
                pl.BlockSpec((1, tk, tn), lambda ib, l, j, k: (l, k, j)),
                pl.BlockSpec((1, 1, tn), lambda ib, l, j, k: (l, 0, j)),
            ],
            out_specs=pl.BlockSpec((tb, F_pad), lambda ib, l, j, k: (ib, 0),
                                   pipeline_mode=pl.Buffered(1)),
            scratch_shapes=scratch_shapes,
        ),
        compiler_params=pltpu.CompilerParams(
            dimension_semantics=("parallel", "arbitrary", "arbitrary",
                                 "arbitrary"),
            vmem_limit_bytes=int(vmem_limit),
        ),
    )(x_p, w_t, b_p)

    if (B_pad, F_pad) != (B, F):
        out = out[:B, :F]
    return out


def mymodel_forward(x, weights, biases):
    """Convenience wrapper: prepare (transpose/pad) + run. Prefer caching
    prepare_params() output and calling mymodel_forward_prepared directly."""
    w_t, b_p, feat = prepare_params(weights, biases)
    return mymodel_forward_prepared(x, w_t, b_p, n_features=feat)


def init_params(key, n_features, n_layers):
    """Deterministic PyTorch-Linear-style init: U(-1/sqrt(F), 1/sqrt(F))."""
    bound = 1.0 / jnp.sqrt(jnp.float32(n_features))
    kw, kb = jax.random.split(key)
    weights = jax.random.uniform(
        kw, (n_layers, n_features, n_features), jnp.float32, -bound, bound)
    biases = jax.random.uniform(
        kb, (n_layers, n_features), jnp.float32, -bound, bound)
    return weights, biases


if __name__ == "__main__":
    key = jax.random.PRNGKey(0)
    k_x, k_p = jax.random.split(key)

    batch, n_features, n_layers = 8, 32, 3
    x = jax.random.normal(k_x, (batch, n_features), jnp.float32)
    weights, biases = init_params(k_p, n_features, n_layers)

    # One-time layout prep (cached as model state), then the Pallas forward.
    w_t, b_p, feat = prepare_params(weights, biases)
    out = jax.block_until_ready(
        mymodel_forward_prepared(x, w_t, b_p, n_features=feat))

    # Pure-JAX reference of the same forward pass (nn.Linear semantics).
    ref = x
    for layer in range(n_layers):
        ref = ref @ weights[layer].T + biases[layer]

    assert out.shape == (batch, n_features)
    assert jnp.allclose(out, ref, atol=1e-5, rtol=1e-5), float(
        jnp.max(jnp.abs(out - ref)))
    print("KERNEL_OK")
</pallas_src>

<mosaic_0001>
module attributes {stable_mosaic.version = 11 : i64} {
  func.func @_mlp_kernel(%arg0: i32, %arg1: i32, %arg2: i32, %arg3: i32, %arg4: memref<8x128xf32, #tpu.memory_space<vmem>>, %arg5: memref<1x128x128xf32, #tpu.memory_space<vmem>>, %arg6: memref<1x1x128xf32, #tpu.memory_space<vmem>>, %arg7: memref<8x128xf32, #tpu.memory_space<vmem>>, %arg8: memref<2x8x128xf32, #tpu.memory_space<vmem>>) attributes {dimension_semantics = [#tpu.dimension_semantics<parallel>, #tpu.dimension_semantics<arbitrary>, #tpu.dimension_semantics<arbitrary>, #tpu.dimension_semantics<arbitrary>], iteration_bounds = array<i64: 1, 3, 1, 1>, scalar_prefetch = 0 : i64, scratch_operands = 1 : i64, tpu.core_type = #tpu.core_type<tc>, window_params = [{pipeline_mode = #tpu.pipeline_mode<synchronous>, transform_indices = @transform_0, window_bounds = array<i64: 8, 128>}, {transform_indices = @transform_1, window_bounds = array<i64: 1, 128, 128>}, {transform_indices = @transform_2, window_bounds = array<i64: 1, 1, 128>}, {pipeline_mode = #tpu.pipeline_mode<synchronous>, transform_indices = @transform_3, window_bounds = array<i64: 8, 128>}]} {
    %c0_i32 = arith.constant 0 : i32
    %0 = arith.cmpi eq, %arg1, %c0_i32 : i32
    %c0_i32_0 = arith.constant 0 : i32
    %1 = arith.cmpi eq, %arg2, %c0_i32_0 : i32
    %2 = arith.andi %0, %1 : i1
    %c0_i32_1 = arith.constant 0 : i32
    %3 = arith.cmpi eq, %arg3, %c0_i32_1 : i32
    %4 = arith.andi %2, %3 : i1
    %5 = arith.extui %4 : i1 to i32
    %c0_i32_2 = arith.constant 0 : i32
    %6 = arith.cmpi ne, %5, %c0_i32_2 : i32
    scf.if %6 {
      %c0_25 = arith.constant 0 : index
      %c0_26 = arith.constant 0 : index
      %44 = vector.load %arg4[%c0_25, %c0_26] : memref<8x128xf32, #tpu.memory_space<vmem>>, vector<8x128xf32>
      %c0_27 = arith.constant 0 : index
      %c0_28 = arith.constant 0 : index
      %c0_29 = arith.constant 0 : index
      %45 = vector.load %arg8[%c0_27, %c0_28, %c0_29] : memref<2x8x128xf32, #tpu.memory_space<vmem>>, vector<1x8x128xf32>
      %46 = vector.shape_cast %45 : vector<1x8x128xf32> to vector<8x128xf32>
      %47 = vector.shape_cast %44 : vector<8x128xf32> to vector<1x8x128xf32>
      tpu.vector_store %arg8[%c0_27, %c0_28, %c0_29], %47 {strides = array<i32>} : memref<2x8x128xf32, #tpu.memory_space<vmem>>, vector<1x8x128xf32>,
    } else {
    }
    %c2_i32 = arith.constant 2 : i32
    %c0_i32_3 = arith.constant 0 : i32
    %7 = arith.cmpi eq, %c2_i32, %c0_i32_3 : i32
    %c1_i32 = arith.constant 1 : i32
    %8 = arith.select %7, %c1_i32, %c2_i32 : i32
    %9 = arith.remsi %arg1, %8 : i32
    %c0_i32_4 = arith.constant 0 : i32
    %10 = arith.cmpi ne, %9, %c0_i32_4 : i32
    %c0_i32_5 = arith.constant 0 : i32
    %11 = arith.cmpi slt, %9, %c0_i32_5 : i32
    %c0_i32_6 = arith.constant 0 : i32
    %12 = arith.cmpi slt, %8, %c0_i32_6 : i32
    %13 = arith.xori %11, %12 : i1
    %14 = arith.andi %13, %10 : i1
    %15 = arith.addi %9, %8 : i32
    %16 = arith.select %14, %15, %9 : i32
    %c1_i32_7 = arith.constant 1 : i32
    %17 = arith.addi %arg1, %c1_i32_7 : i32
    %c2_i32_8 = arith.constant 2 : i32
    %c0_i32_9 = arith.constant 0 : i32
    %18 = arith.cmpi eq, %c2_i32_8, %c0_i32_9 : i32
    %c1_i32_10 = arith.constant 1 : i32
    %19 = arith.select %18, %c1_i32_10, %c2_i32_8 : i32
    %20 = arith.remsi %17, %19 : i32
    %c0_i32_11 = arith.constant 0 : i32
    %21 = arith.cmpi ne, %20, %c0_i32_11 : i32
    %c0_i32_12 = arith.constant 0 : i32
    %22 = arith.cmpi slt, %20, %c0_i32_12 : i32
    %c0_i32_13 = arith.constant 0 : i32
    %23 = arith.cmpi slt, %19, %c0_i32_13 : i32
    %24 = arith.xori %22, %23 : i1
    %25 = arith.andi %24, %21 : i1
    %26 = arith.addi %20, %19 : i32
    %27 = arith.select %25, %26, %20 : i32
    %c0 = arith.constant 0 : index
    %c0_14 = arith.constant 0 : index
    %c0_15 = arith.constant 0 : index
    %28 = vector.load %arg5[%c0, %c0_14, %c0_15] : memref<1x128x128xf32, #tpu.memory_space<vmem>>, vector<1x128x128xf32>
    %29 = vector.shape_cast %28 : vector<1x128x128xf32> to vector<128x128xf32>
    %30 = arith.index_cast %16 : i32 to index
    %c0_16 = arith.constant 0 : index
    %c0_17 = arith.constant 0 : index
    %31 = vector.load %arg8[%30, %c0_16, %c0_17] : memref<2x8x128xf32, #tpu.memory_space<vmem>>, vector<1x8x128xf32>
    %32 = vector.shape_cast %31 : vector<1x8x128xf32> to vector<8x128xf32>
    %cst = arith.constant dense<0.000000e+00> : vector<8x128xf32>
    %33 = tpu.matmul %32, %29, %cst {dimension_numbers = #tpu.dot_dimension_numbers<[1], [0], [0], [1], [0, 0, 1, 1], [], []>} : vector<8x128xf32>, vector<128x128xf32>, vector<8x128xf32> -> vector<8x128xf32>
    %c0_18 = arith.constant 0 : index
    %c0_19 = arith.constant 0 : index
    %c0_20 = arith.constant 0 : index
    %34 = vector.load %arg6[%c0_18, %c0_19, %c0_20] : memref<1x1x128xf32, #tpu.memory_space<vmem>>, vector<1x1x128xf32>
    %35 = vector.shape_cast %34 : vector<1x1x128xf32> to vector<1x128xf32>
    %36 = vector.broadcast %35 : vector<1x128xf32> to vector<8x128xf32>
    %37 = arith.addf %33, %36 : vector<8x128xf32>
    %c2_i32_21 = arith.constant 2 : i32
    %38 = arith.cmpi slt, %arg1, %c2_i32_21 : i32
    %39 = arith.extui %38 : i1 to i32
    %c0_i32_22 = arith.constant 0 : i32
    %40 = arith.cmpi ne, %39, %c0_i32_22 : i32
    scf.if %40 {
      %44 = arith.index_cast %27 : i32 to index
      %c0_25 = arith.constant 0 : index
      %c0_26 = arith.constant 0 : index
      %45 = vector.load %arg8[%44, %c0_25, %c0_26] : memref<2x8x128xf32, #tpu.memory_space<vmem>>, vector<1x8x128xf32>
      %46 = vector.shape_cast %45 : vector<1x8x128xf32> to vector<8x128xf32>
      %47 = vector.shape_cast %37 : vector<8x128xf32> to vector<1x8x128xf32>
      tpu.vector_store %arg8[%44, %c0_25, %c0_26], %47 {strides = array<i32>} : memref<2x8x128xf32, #tpu.memory_space<vmem>>, vector<1x8x128xf32>,
    } else {
    }
    %c2_i32_23 = arith.constant 2 : i32
    %41 = arith.cmpi eq, %arg1, %c2_i32_23 : i32
    %42 = arith.extui %41 : i1 to i32
    %c0_i32_24 = arith.constant 0 : i32
    %43 = arith.cmpi ne, %42, %c0_i32_24 : i32
    scf.if %43 {
      %c0_25 = arith.constant 0 : index
      %c0_26 = arith.constant 0 : index
      %44 = vector.load %arg7[%c0_25, %c0_26] : memref<8x128xf32, #tpu.memory_space<vmem>>, vector<8x128xf32>
      tpu.vector_store %arg7[%c0_25, %c0_26], %37 {strides = array<i32>} : memref<8x128xf32, #tpu.memory_space<vmem>>, vector<8x128xf32>,
    } else {
    }
    return
  }
  func.func @transform_0(%arg0: i32, %arg1: i32, %arg2: i32, %arg3: i32) -> (i32, i32) {
    %c0_i32 = arith.constant 0 : i32
    %c0_i32_0 = arith.constant 0 : i32
    return %arg0, %c0_i32 : i32, i32
  }
  func.func @transform_1(%arg0: i32, %arg1: i32, %arg2: i32, %arg3: i32) -> (i32, i32, i32) {
    %c0_i32 = arith.constant 0 : i32
    return %arg1, %arg3, %arg2 : i32, i32, i32
  }
  func.func @transform_2(%arg0: i32, %arg1: i32, %arg2: i32, %arg3: i32) -> (i32, i32, i32) {
    %c0_i32 = arith.constant 0 : i32
    %c0_i32_0 = arith.constant 0 : i32
    return %arg1, %c0_i32, %arg2 : i32, i32, i32
  }
  func.func @transform_3(%arg0: i32, %arg1: i32, %arg2: i32, %arg3: i32) -> (i32, i32) {
    %c0_i32 = arith.constant 0 : i32
    %c0_i32_0 = arith.constant 0 : i32
    return %arg0, %c0_i32 : i32, i32
  }
}

</mosaic_0001>

<llo_original>
// kernel: tpu_custom_call.1
$region0: #{tpu_custom_call.1}
  #allocation0 [shape = 'u32[]', space=smem, size = 0x4, offset = 0x4, fixed_abs, tag = 'smem constant byte address 0x4 - core index']
  #allocation1 [shape = 'u32[144,128]{1,0:T(1,128)}', space=vmem, size = 0x12000, scoped, tag = 'internal scratch']
  #allocation2 [shape = 'f32[2,8,128]{2,1,0:T(8,128)}', space=vmem, size = 0x2000, scoped, tag = 'scratch operand']
  %s0 = inlined_call_operand.hbm [shape: f32[8,128], index: 0, kind: input, shape index: {}]
  %s1 = inlined_call_operand.hbm [shape: f32[3,128,128], index: 1, kind: input, shape index: {}]
  %s2 = inlined_call_operand.vmem [shape: f32[3,1,128], index: 2, kind: input, shape index: {}]
  %s3 = inlined_call_operand.hbm [shape: f32[8,128], index: 3, kind: output, shape index: {}]
  %s4 = sld [smem:[#allocation0]]
  $region65: #{tpu_custom_call.1} parent=0
    _
  %s6 = ssub.s32 1, %s4
  %s7 = scalar_select 0, %s6, %s4
  $region1: #{tpu_custom_call.1} parent=0
    #allocation3 [shape = 'u8[4096]{0}', space=vmem, size = 0x1000, scoped, tag = 'input window, operand 0, single buffered']
    #allocation4 [shape = 's32[2]{0}', space=sflag, size = 0x8, scoped, tag = 'scoped memory for tpu_custom_call.1']
    #allocation5 [shape = 's32[2]{0}', space=sflag, size = 0x8, scoped, tag = 'scoped memory for tpu_custom_call.1']
    #allocation6 [shape = 'u8[131072]{0}', space=vmem, size = 0x20000, scoped, tag = 'input window, operand 1']
    #allocation7 [shape = 's32[2]{0}', space=sflag, size = 0x8, scoped, tag = 'scoped memory for tpu_custom_call.1']
    #allocation8 [shape = 'u8[4096]{0}', space=vmem, size = 0x1000, scoped, tag = 'output window, operand 0, single buffered']
    %8 = vsyncpa [#allocation4], 0
    %9 = vsyncpa [#allocation7], 0
    %s10 = scalar_lea.sflag [#allocation7], 1
    %11 = vsyncpa %s10, 0
    %12 = vsyncpa [#allocation5], 0
    loop: start=0, step=1, limit=5
    $region2: #{tpu_custom_call.1} parent=1 // loop_pre_header
      _
    $region3: #{tpu_custom_call.1} parent=1 // loop_header
      %s14 = sphi 0, %s18
      %p15 = scmp.ge.s32.totalorder %s14, 5
      %s21 = sphi 0, %s47
      %s22 = sphi 0, %s43
      %s23 = sphi 0, %s39
      %s24 = sphi 0, %s35
      %s25 = sphi 0, %s21
      %s26 = sphi 0, %s22
      %s27 = sphi 0, %s23
      %s28 = sphi 0, %s24
      %s29 = sphi 0, %s25
      %s30 = sphi 0, %s26
      %s31 = sphi 0, %s27
      %s32 = sphi 0, %s28
      %s50 = sphi 0, %s52
      %s53 = sphi 0, %s50
      %s54 = sphi 0, %s53
      %s70 = sphi 0, %s54
      %s80 = sphi 0, %s82
      %s83 = sphi 0, %s80
      %s84 = sphi 0, %s83
      %s100 = sphi 0, %s84
      %s108 = sphi 0, %s110
      %s111 = sphi 0, %s108
      %s112 = sphi 0, %s111
      %s128 = sphi 0, %s112
      %s134 = sphi 0, %s136
      %s137 = sphi 0, %s134
      %s138 = sphi 0, %s137
      %s154 = sphi 0, %s138
    $region4: #{tpu_custom_call.1} parent=1 // loop_header_branch
      %17 = sbr.rel (%p15) target = $region8
    $region5: #{tpu_custom_call.1} parent=1 // loop_body
      %s19 = ssub.s32 %s14, 1
      %s20 = ssub.s32 %s14, 2
      %s33 = sadd.s32 1, %s24
      %p34 = scmp.ge.s32.totalorder %s33, 1
      %s35 = scalar_select %p34, 0, %s33
      %s36 = sadd.s32 1, %s23
      %s37 = scalar_select %p34, %s36, %s23
      %p38 = scmp.ge.s32.totalorder %s37, 1
      %s39 = scalar_select %p38, 0, %s37
      %s40 = sadd.s32 1, %s22
      %s41 = scalar_select %p38, %s40, %s22
      %p42 = scmp.ge.s32.totalorder %s41, 3
      %s43 = scalar_select %p42, 0, %s41
      %s44 = sadd.s32 1, %s21
      %s45 = scalar_select %p42, %s44, %s21
      %p46 = scmp.ge.s32.totalorder %s45, 1
      %s47 = scalar_select %p46, 0, %s45
      %s48 = ssub.s32 %s21, %s47
      %p49 = scmp.eq.s32.totalorder %s48, 0
      %s51 = sadd.s32 %s50, 1
      %s52 = scalar_select %p49, %s50, %s51
      %p55 = pneg %p49
      %p56 = scmp.eq.s32.totalorder %s14, 2
      %p57 = por %p55, %p56
      %p58 = scmp.ne.s32.totalorder %s50, %s53
      %p59 = scmp.eq.s32.totalorder %s14, 0
      %p60 = por %p58, %p59
      %p61 = scmp.ne.s32.totalorder %s50, %s53
      %p62 = scmp.eq.s32.totalorder %s19, 2
      %p63 = por %p61, %p62
      %p64 = scmp.ne.s32.totalorder %s53, %s54
      %p65 = scmp.eq.s32.totalorder %s19, 0
      %p66 = por %p64, %p65
      %p67 = scmp.ne.s32.totalorder %s53, %s54
      %p68 = scmp.eq.s32.totalorder %s20, 2
      %p69 = por %p67, %p68
      %p71 = scmp.ne.s32.totalorder %s54, %s70
      %p72 = scmp.eq.s32.totalorder %s20, 0
      %p73 = por %p71, %p72
      %s74 = ssub.s32 %s22, %s43
      %s75 = ssub.s32 %s24, %s35
      %s76 = sor.u32 %s74, %s75
      %s77 = ssub.s32 %s23, %s39
      %s78 = sor.u32 %s76, %s77
      %p79 = scmp.eq.s32.totalorder %s78, 0
      %s81 = sadd.s32 %s80, 1
      %s82 = scalar_select %p79, %s80, %s81
      %p85 = pneg %p79
      %p86 = scmp.eq.s32.totalorder %s14, 2
      %p87 = por %p85, %p86
      %p88 = scmp.ne.s32.totalorder %s80, %s83
      %p89 = scmp.eq.s32.totalorder %s14, 0
      %p90 = por %p88, %p89
      %p91 = scmp.ne.s32.totalorder %s80, %s83
      %p92 = scmp.eq.s32.totalorder %s19, 2
      %p93 = por %p91, %p92
      %p94 = scmp.ne.s32.totalorder %s83, %s84
      %p95 = scmp.eq.s32.totalorder %s19, 0
      %p96 = por %p94, %p95
      %p97 = scmp.ne.s32.totalorder %s83, %s84
      %p98 = scmp.eq.s32.totalorder %s20, 2
      %p99 = por %p97, %p98
      %p101 = scmp.ne.s32.totalorder %s84, %s100
      %p102 = scmp.eq.s32.totalorder %s20, 0
      %p103 = por %p101, %p102
      %s104 = ssub.s32 %s22, %s43
      %s105 = ssub.s32 %s23, %s39
      %s106 = sor.u32 %s104, %s105
      %p107 = scmp.eq.s32.totalorder %s106, 0
      %s109 = sadd.s32 %s108, 1
      %s110 = scalar_select %p107, %s108, %s109
      %p113 = pneg %p107
      %p114 = scmp.eq.s32.totalorder %s14, 2
      %p115 = por %p113, %p114
      %p116 = scmp.ne.s32.totalorder %s108, %s111
      %p117 = scmp.eq.s32.totalorder %s14, 0
      %p118 = por %p116, %p117
      %p119 = scmp.ne.s32.totalorder %s108, %s111
      %p120 = scmp.eq.s32.totalorder %s19, 2
      %p121 = por %p119, %p120
      %p122 = scmp.ne.s32.totalorder %s111, %s112
      %p123 = scmp.eq.s32.totalorder %s19, 0
      %p124 = por %p122, %p123
      %p125 = scmp.ne.s32.totalorder %s111, %s112
      %p126 = scmp.eq.s32.totalorder %s20, 2
      %p127 = por %p125, %p126
      %p129 = scmp.ne.s32.totalorder %s112, %s128
      %p130 = scmp.eq.s32.totalorder %s20, 0
      %p131 = por %p129, %p130
      %s132 = ssub.s32 %s21, %s47
      %p133 = scmp.eq.s32.totalorder %s132, 0
      %s135 = sadd.s32 %s134, 1
      %s136 = scalar_select %p133, %s134, %s135
      %p139 = pneg %p133
      %p140 = scmp.eq.s32.totalorder %s14, 2
      %p141 = por %p139, %p140
      %p142 = scmp.ne.s32.totalorder %s134, %s137
      %p143 = scmp.eq.s32.totalorder %s14, 0
      %p144 = por %p142, %p143
      %p145 = scmp.ne.s32.totalorder %s134, %s137
      %p146 = scmp.eq.s32.totalorder %s19, 2
      %p147 = por %p145, %p146
      %p148 = scmp.ne.s32.totalorder %s137, %s138
      %p149 = scmp.eq.s32.totalorder %s19, 0
      %p150 = por %p148, %p149
      %p151 = scmp.ne.s32.totalorder %s137, %s138
      %p152 = scmp.eq.s32.totalorder %s20, 2
      %p153 = por %p151, %p152
      %p155 = scmp.ne.s32.totalorder %s138, %s154
      %p156 = scmp.eq.s32.totalorder %s20, 0
      %p157 = por %p155, %p156
      %p158 = scmp.le.s32.totalorder 1, %s14
      %p159 = scmp.lt.s32.totalorder %s14, 4
      %p160 = pnand %p158, %p159
      %p161 = pneg %p160
      // Predicated region
      $region9: #{tpu_custom_call.1} parent=5 // pred_check
        _
      $region10: #{tpu_custom_call.1} parent=5 // pred_check_branch
        %163 = sbr.rel (%p160) target = $region12
      $region11: #{tpu_custom_call.1} parent=5 // pred_region
        %s164 = ssub.s32 %s14, 1
        // Predicated region
        $region13: #{tpu_custom_call.1} parent=11 // pred_check
          %p165 = pneg %p66
        $region14: #{tpu_custom_call.1} parent=11 // pred_check_branch
          %167 = sbr.rel (%p165) target = $region16
        $region15: #{tpu_custom_call.1} parent=11 // pred_region
          %s169 = ssub.s32 128, 128
          %170 = vsyncadd [#allocation4], %s169
          %s171 = smul.addr %s25, 128
          %s172 = scalar_lea.hbm %s0, %s171
          %s174 = sshll.u32 [#allocation3], 4
          %s175 = int_to_ptr.vmem [resolvable:$true] %s174
          %177 = dma.hbm_to_vmem [thread:$0]  %s172, 128, %s175, [#allocation4]
        $region16: #{tpu_custom_call.1} parent=11 // pred_fallthru
          _
      $region12: #{tpu_custom_call.1} parent=5 // pred_fallthru
        _
      %p178 = scmp.lt.s32.totalorder %s14, 3
      // Predicated region
      $region17: #{tpu_custom_call.1} parent=5 // pred_check
        %p179 = pneg %p178
      $region18: #{tpu_custom_call.1} parent=5 // pred_check_branch
        %181 = sbr.rel (%p179) target = $region20
      $region19: #{tpu_custom_call.1} parent=5 // pred_region
        // Predicated region
        $region21: #{tpu_custom_call.1} parent=19 // pred_check
          %p182 = pneg %p90
        $region22: #{tpu_custom_call.1} parent=19 // pred_check_branch
          %184 = sbr.rel (%p182) target = $region24
        $region23: #{tpu_custom_call.1} parent=19 // pred_region
          %s185 = sand.u32 %s80, 1
          %s186 = scalar_lea.sflag [#allocation7], %s185
          %s187 = sand.u32 %s80, 1
          %s188 = smul.addr %s187, 128
          %s189 = scalar_lea.vmem [#allocation6], %s188
          %s190 = smul.u32 16, %s24
          %s192 = ssub.s32 2048, 2048
          %193 = vsyncadd %s186, %s192
          %s194 = sadd.s32 %s23, %s190
          %s195 = smul.addr %s22, 16
          %s196 = sadd.s32 %s194, %s195
          %s197 = smul.addr %s196, 128
          %s198 = scalar_lea.hbm %s1, %s197
          %s199 = sshll.u32 %s189, 4
          %s200 = int_to_ptr.vmem [resolvable:$true] %s199
          %205 = dma.hbm_to_vmem [thread:$0]  %s198, 2048, %s200, %s186, 128, 128, 8
        $region24: #{tpu_custom_call.1} parent=19 // pred_fallthru
          _
        // Predicated region
        $region25: #{tpu_custom_call.1} parent=19 // pred_check
          %p206 = pneg %p118
        $region26: #{tpu_custom_call.1} parent=19 // pred_check_branch
          %208 = sbr.rel (%p206) target = $region28
        $region27: #{tpu_custom_call.1} parent=19 // pred_region
          %p209 = scmp.lt.s32.totalorder %s22, 2
          %s210 = scalar_select %p209, %s22, 2
          %p211 = scmp.lt.s32.totalorder %s23, 0
          %s212 = scalar_select %p211, %s23, 0
          %s213 = sadd.s32 %s212, %s210
          %s214 = scalar_lea.vmem %s2, %s213
        $region28: #{tpu_custom_call.1} parent=19 // pred_fallthru
          _
      $region20: #{tpu_custom_call.1} parent=5 // pred_fallthru
        _
      %p215 = scmp.le.s32.totalorder 1, %s14
      %p216 = scmp.lt.s32.totalorder %s14, 4
      %p217 = pnand %p215, %p216
      %p218 = pneg %p217
      // Predicated region
      $region29: #{tpu_custom_call.1} parent=5 // pred_check
        _
      $region30: #{tpu_custom_call.1} parent=5 // pred_check_branch
        %220 = sbr.rel (%p217) target = $region32
      $region31: #{tpu_custom_call.1} parent=5 // pred_region
        %s221 = ssub.s32 %s14, 1
        // Predicated region
        $region33: #{tpu_custom_call.1} parent=31 // pred_check
          %p222 = pneg %p66
        $region34: #{tpu_custom_call.1} parent=31 // pred_check_branch
          %224 = sbr.rel (%p222) target = $region36
        $region35: #{tpu_custom_call.1} parent=31 // pred_region
          %225 = dma.done [#allocation4], 128
        $region36: #{tpu_custom_call.1} parent=31 // pred_fallthru
          _
        %s226 = sand.u32 %s83, 1
        %s227 = scalar_lea.sflag [#allocation7], %s226
        %s228 = sand.u32 %s83, 1
        %s229 = smul.addr %s228, 128
        %s230 = scalar_lea.vmem [#allocation6], %s229
        // Predicated region
        $region37: #{tpu_custom_call.1} parent=31 // pred_check
          %p231 = pneg %p96
        $region38: #{tpu_custom_call.1} parent=31 // pred_check_branch
          %233 = sbr.rel (%p231) target = $region40
        $region39: #{tpu_custom_call.1} parent=31 // pred_region
          %234 = dma.done %s227, 2048
        $region40: #{tpu_custom_call.1} parent=31 // pred_fallthru
          _
        %p235 = pneg %p66
        %p236 = pneg %p63
        %s237 = sand.u32 %s83, 1
        %s238 = scalar_lea.sflag [#allocation7], %s237
        %s239 = sand.u32 %s83, 1
        %s240 = smul.addr %s239, 128
        %s241 = scalar_lea.vmem [#allocation6], %s240
        %p242 = pneg %p96
        %p243 = pneg %p93
        %p244 = scmp.lt.s32.totalorder %s26, 2
        %s245 = scalar_select %p244, %s26, 2
        %p246 = scmp.lt.s32.totalorder %s27, 0
        %s247 = scalar_select %p246, %s27, 0
        %s248 = sadd.s32 %s247, %s245
        %s249 = scalar_lea.vmem %s2, %s248
        %p250 = pneg %p124
        %p251 = pneg %p121
        %p252 = pneg %p150
        %p253 = pneg %p147
        %s254 = smul.u32 16, %s28
        %p255 = scmp.lt.s32.totalorder %s26, 2
        %s256 = scalar_select %p255, %s26, 2
        %p257 = scmp.lt.s32.totalorder %s27, 0
        %s258 = scalar_select %p257, %s27, 0
        %s259 = sadd.s32 %s258, %s256
        %s260 = scalar_lea.vmem %s2, %s259
        %p261 = scmp.eq.s32.totalorder %s26, 0
        %p262 = scmp.eq.s32.totalorder %s27, 0
        %p263 = pnand %p261, %p262
        %p264 = pneg %p263
        %p265 = scmp.eq.s32.totalorder %s28, 0
        %p266 = pnand %p264, %p265
        %p267 = pneg %p266
        // Predicated region
        $region41: #{tpu_custom_call.1} parent=31 // pred_check
          _
        $region42: #{tpu_custom_call.1} parent=31 // pred_check_branch
          %269 = sbr.rel (%p266) target = $region44
        $region43: #{tpu_custom_call.1} parent=31 // pred_region
          %v270 = vld [vmem:[#allocation3] sm:$0xff]
          %271 = vst [vmem:[#allocation2] sm:$0xff] %v270
        $region44: #{tpu_custom_call.1} parent=31 // pred_fallthru
          _
        %p272 = scmp.lt.s32.totalorder %s26, 0
        %s273 = ssub.s32 0, %s26
        %s274 = scalar_select %p272, %s273, %s26
        %s275 = sand.u32 %s274, 1
        %s276 = ssub.s32 0, %s275
        %s277 = scalar_select %p272, %s276, %s275
        %p278 = scmp.ne.s32.totalorder %s277, 0
        %p279 = scmp.lt.s32.totalorder %s277, 0
        %p280 = pnand %p279, %p278
        %p281 = pneg %p280
        %s282 = sadd.s32 %s277, 2
        %s283 = scalar_select %p281, %s282, %s277
        %s284 = sadd.s32 %s26, 1
        %p285 = scmp.lt.s32.totalorder %s284, 0
        %s286 = ssub.s32 0, %s284
        %s287 = scalar_select %p285, %s286, %s284
        %s288 = sand.u32 %s287, 1
        %s289 = ssub.s32 0, %s288
        %s290 = scalar_select %p285, %s289, %s288
        %p291 = scmp.ne.s32.totalorder %s290, 0
        %p292 = scmp.lt.s32.totalorder %s290, 0
        %p293 = pnand %p292, %p291
        %p294 = pneg %p293
        %s295 = sadd.s32 %s290, 2
        %s296 = scalar_select %p294, %s295, %s290
        %v297 = vld [vmem:[%s230] sm:$0xff]
        %v298 = vld [vmem:[%s230 + $0x8] sm:$0xff]
        %v299 = vld [vmem:[%s230 + $0x10] sm:$0xff]
        %v300 = vld [vmem:[%s230 + $0x18] sm:$0xff]
        %v301 = vld [vmem:[%s230 + $0x20] sm:$0xff]
        %v302 = vld [vmem:[%s230 + $0x28] sm:$0xff]
        %v303 = vld [vmem:[%s230 + $0x30] sm:$0xff]
        %v304 = vld [vmem:[%s230 + $0x38] sm:$0xff]
        %v305 = vld [vmem:[%s230 + $0x40] sm:$0xff]
        %v306 = vld [vmem:[%s230 + $0x48] sm:$0xff]
        %v307 = vld [vmem:[%s230 + $0x50] sm:$0xff]
        %v308 = vld [vmem:[%s230 + $0x58] sm:$0xff]
        %v309 = vld [vmem:[%s230 + $0x60] sm:$0xff]
        %v310 = vld [vmem:[%s230 + $0x68] sm:$0xff]
        %v311 = vld [vmem:[%s230 + $0x70] sm:$0xff]
        %v312 = vld [vmem:[%s230 + $0x78] sm:$0xff]
        %s313 = smul.u32 %s283, 8
        %s314 = scalar_lea.vmem [#allocation2], %s313
        %v315 = vld [vmem:[%s314] sm:$0xff]
        %v316 = vld [vmem:[%s260] sm:$0x1]
        %v318 = vlaneseq
        %v319 = vshrl.u32 %v318, 7
        %v320 = vsub.s32 0, %v319
        %v321 = vrot.slane %v316, %v320
        %323 = vmatprep.subr.mxu0 0.0
        %324 = vmatpush1.msra.mxu0 %v297
        %325 = vmatprep.subr.mxu0 0.0
        %326 = vmatpush1.msra.mxu0 %v298
        %327 = vmatprep.subr.mxu0 0.0
        %328 = vmatpush1.msra.mxu0 %v299
        %329 = vmatprep.subr.mxu0 0.0
        %330 = vmatpush1.msra.mxu0 %v300
        %331 = vmatprep.subr.mxu0 0.0
        %332 = vmatpush1.msra.mxu0 %v301
        %333 = vmatprep.subr.mxu0 0.0
        %334 = vmatpush1.msra.mxu0 %v302
        %335 = vmatprep.subr.mxu0 0.0
        %336 = vmatpush1.msra.mxu0 %v303
        %337 = vmatprep.subr.mxu0 0.0
        %338 = vmatpush1.msra.mxu0 %v304
        %339 = vmatprep.subr.mxu0 0.0
        %340 = vmatpush1.msra.mxu0 %v305
        %341 = vmatprep.subr.mxu0 0.0
        %342 = vmatpush1.msra.mxu0 %v306
        %343 = vmatprep.subr.mxu0 0.0
        %344 = vmatpush1.msra.mxu0 %v307
        %345 = vmatprep.subr.mxu0 0.0
        %346 = vmatpush1.msra.mxu0 %v308
        %347 = vmatprep.subr.mxu0 0.0
        %348 = vmatpush1.msra.mxu0 %v309
        %349 = vmatprep.subr.mxu0 0.0
        %350 = vmatpush1.msra.mxu0 %v310
        %351 = vmatprep.subr.mxu0 0.0
        %352 = vmatpush1.msra.mxu0 %v311
        %353 = vmatprep.subr.mxu0 0.0
        %354 = vmatpush1.msra.mxu0 %v312
        %355 = vmatprep.subr.mxu0 0.0
        %356 = vmatpush1.msra.mxu0 0.0
        %357 = vmatprep.subr.mxu0 0.0
        %358 = vmatpush1.msra.mxu0 0.0
        %359 = vmatprep.subr.mxu0 0.0
        %360 = vmatpush1.msra.mxu0 0.0
        %361 = vmatprep.subr.mxu0 0.0
        %362 = vmatpush1.msra.mxu0 0.0
        %363 = vmatprep.subr.mxu0 0.0
        %364 = vmatpush1.msra.mxu0 0.0
        %365 = vmatprep.subr.mxu0 0.0
        %366 = vmatpush1.msra.mxu0 0.0
        %367 = vmatprep.subr.mxu0 0.0
        %368 = vmatpush1.msra.mxu0 0.0
        %369 = vmatprep.subr.mxu0 0.0
        %370 = vmatpush1.msra.mxu0 0.0
        %371 = vmatprep.subr.mxu0 0.0
        %372 = vmatpush1.msra.mxu0 0.0
        %373 = vmatprep.subr.mxu0 0.0
        %374 = vmatpush1.msra.mxu0 0.0
        %375 = vmatprep.subr.mxu0 0.0
        %376 = vmatpush1.msra.mxu0 0.0
        %377 = vmatprep.subr.mxu0 0.0
        %378 = vmatpush1.msra.mxu0 0.0
        %379 = vmatprep.subr.mxu0 0.0
        %380 = vmatpush1.msra.mxu0 0.0
        %381 = vmatprep.subr.mxu0 0.0
        %382 = vmatpush1.msra.mxu0 0.0
        %383 = vmatprep.subr.mxu0 0.0
        %384 = vmatpush1.msra.mxu0 0.0
        %385 = vmatprep.subr.mxu0 0.0
        %386 = vmatpush1.msra.mxu0 0.0
        %387 = vmatprep.mubr.f32.mxu0 0.0
        %388 = vmatmul.mubr.f32.gmra.mrb[0].mxu0 %v315
        %v389 = vpop.f32.mrb[0].mxu0
        %v390 = vadd.f32 %v321, %v389
        %v391 = vpop.f32.mrb[0].mxu0
        %392 = vdwg.mxu0
        %p393 = scmp.lt.s32.totalorder %s26, 2
        // Predicated region
        $region45: #{tpu_custom_call.1} parent=31 // pred_check
          %p394 = pneg %p393
        $region46: #{tpu_custom_call.1} parent=31 // pred_check_branch
          %396 = sbr.rel (%p394) target = $region48
        $region47: #{tpu_custom_call.1} parent=31 // pred_region
          %s397 = smul.u32 %s296, 8
          %s398 = scalar_lea.vmem [#allocation2], %s397
          %399 = vst [vmem:[%s398] sm:$0xff] %v390
        $region48: #{tpu_custom_call.1} parent=31 // pred_fallthru
          _
        %p400 = scmp.eq.s32.totalorder %s26, 2
        // Predicated region
        $region49: #{tpu_custom_call.1} parent=31 // pred_check
          %p401 = pneg %p400
        $region50: #{tpu_custom_call.1} parent=31 // pred_check_branch
          %403 = sbr.rel (%p401) target = $region52
        $region51: #{tpu_custom_call.1} parent=31 // pred_region
          %404 = vst [vmem:[#allocation8] sm:$0xff] %v390
        $region52: #{tpu_custom_call.1} parent=31 // pred_fallthru
          _
        // Predicated region
        $region53: #{tpu_custom_call.1} parent=31 // pred_check
          %p405 = pneg %p147
        $region54: #{tpu_custom_call.1} parent=31 // pred_check_branch
          %407 = sbr.rel (%p405) target = $region56
        $region55: #{tpu_custom_call.1} parent=31 // pred_region
          %s409 = ssub.s32 128, 128
          %410 = vsyncadd [#allocation5], %s409
          %s411 = smul.addr %s25, 128
          %s412 = scalar_lea.hbm %s3, %s411
          %s414 = sshll.u32 [#allocation8], 4
          %s415 = int_to_ptr.vmem [resolvable:$true] %s414
          %417 = dma.vmem_to_hbm [thread:$0]  %s415, 128, %s412, [#allocation5]
        $region56: #{tpu_custom_call.1} parent=31 // pred_fallthru
          _
        // Predicated region
        $region57: #{tpu_custom_call.1} parent=31 // pred_check
          %p418 = pneg %p147
        $region58: #{tpu_custom_call.1} parent=31 // pred_check_branch
          %420 = sbr.rel (%p418) target = $region60
        $region59: #{tpu_custom_call.1} parent=31 // pred_region
          %421 = dma.done [#allocation5], 128
        $region60: #{tpu_custom_call.1} parent=31 // pred_fallthru
          _
      $region32: #{tpu_custom_call.1} parent=5 // pred_fallthru
        _
      %p422 = scmp.le.s32.totalorder 2, %s14
      // Predicated region
      $region61: #{tpu_custom_call.1} parent=5 // pred_check
        %p423 = pneg %p422
      $region62: #{tpu_custom_call.1} parent=5 // pred_check_branch
        %425 = sbr.rel (%p423) target = $region64
      $region63: #{tpu_custom_call.1} parent=5 // pred_region
        %s426 = ssub.s32 %s14, 2
      $region64: #{tpu_custom_call.1} parent=5 // pred_fallthru
        _
    $region6: #{tpu_custom_call.1} parent=1 // loop_footer
      %s18 = sadd.s32 1, %s14
    $region7: #{tpu_custom_call.1} parent=1 // loop_footer_branch
      %13 = sbr.rel target = $region3
    $region8: #{tpu_custom_call.1} parent=1 // loop_exit
      _
    %427 = vsyncpa [#allocation4], 1
    %s428 = scalar_lea.sflag [#allocation4], 1
    %429 = vsyncpa %s428, 1
    %430 = vsyncpa [#allocation7], 1
    %s431 = scalar_lea.sflag [#allocation7], 1
    %432 = vsyncpa %s431, 1
    %433 = vsyncpa [#allocation5], 1
    %s434 = scalar_lea.sflag [#allocation5], 1
    %435 = vsyncpa %s434, 1

</llo_original>
